<compile_context>
chip_gen: v7x
topology: tpu7x:2x2x1
jax: 0.10.0
libtpu: 0.0.40
codegen_flags: <defaults>
</compile_context>

<pallas_src>
import jax
import jax.numpy as jnp
from jax.experimental import pallas as pl
from jax.experimental.pallas import tpu as pltpu

SMOOTH_FACTOR = 0.1
IGNORE_INDEX = -100.0

# Per-step VMEM working-set budget used to size tiles (2x double-buffered
# y_pred + y_true tiles, sublane padding, ~6 live f32 temporaries), plus the
# explicit scoped-VMEM limit handed to Mosaic.  Both fit every generation
# (v5e/v6e 128 MiB physical, v7x 64 MiB physical).
_VMEM_BUDGET_BYTES = 32 * 1024 * 1024
_VMEM_LIMIT_BYTES = 48 * 1024 * 1024
_TEMPS_F32 = 6          # live full-tile f32 intermediates (x, sp_pos, sp_neg, a, b, prod)


def _round_up(v, m):
    return ((v + m - 1) // m) * m


def _pick_sublane_fold(C, HW, target):
    """Smallest S such that C*S is a multiple of `target` sublanes and HW % S == 0.
    Falls back to a multiple of 8, then to S = 1 (no fold)."""
    targets = (target,) if target == 8 else (target, 8)
    for tgt in targets:
        for S in range(1, tgt + 1):
            if (C * S) % tgt == 0 and HW % S == 0:
                return S
    return 1


def _make_kernel(C, hw_tile, hw_valid, has_tail):
    def kernel(yp_ref, yt_ref, w_ref, wpw_ref, out_ref):
        h = pl.program_id(1)

        # Upcast after the (possibly bf16) tiles land in VMEM; all math is f32.
        x = yp_ref[...].astype(jnp.float32)       # (Nb, C*S, T)  logits
        t = yt_ref[...].astype(jnp.float32)       # (Nb, S, T)    raw targets

        # --- row-only work on the S target rows ---------------------------
        # label smoothing + ignore mask folded into the two softplus coeffs.
        st = (1.0 - t) * SMOOTH_FACTOR + t * (1.0 - SMOOTH_FACTOR)
        valid = t != IGNORE_INDEX
        if has_tail:
            # cdiv tiling: mask lanes past the true row length in the last block.
            lane = jax.lax.broadcasted_iota(jnp.int32, (1, 1, hw_tile), 2)
            lane_ok = lane < (hw_valid - h * hw_tile)
            valid = jnp.logical_and(valid, lane_ok)
            # zero padded logits so 0 * softplus(garbage) can never be NaN/Inf
            x = jnp.where(lane_ok, x, 0.0)
        a = jnp.where(valid, 1.0 - st, 0.0)       # coefficient of softplus(x)
        b = jnp.where(valid, st, 0.0)             # coefficient of softplus(-x)
        # Replicate the S coefficient rows across the C channel groups so they
        # line up with the (C*S)-row folded y_pred tile (sublane broadcast).
        a = jnp.tile(a, (1, C, 1))                # (Nb, C*S, T)
        b = jnp.tile(b, (1, C, 1))

        # --- per-element work: numerically stable softplus pair -----------
        # TODO(synk): on v6e/v7x evaluate log1p(exp(-|x|)) in bf16 (2x EUP)
        # once tolerances are re-derived; keep f32 on v5e (no bf16 EUP).
        sp_pos = jnp.maximum(x, 0.0) + jnp.log1p(jnp.exp(-jnp.abs(x)))
        sp_neg = sp_pos - x

        # Per-channel-row lane sums first; weight / pos_weight multiply the
        # (C*S, 1) sums instead of every element.
        # TODO(synk): if a bundle dump shows VALU saturating (v7x), move these
        # weighted reductions onto the MXU via a (T, 2) rhs matmul.
        A = jnp.sum(a * sp_pos, axis=-1, keepdims=True)   # (Nb, C*S, 1)
        B = jnp.sum(b * sp_neg, axis=-1, keepdims=True)
        vec = w_ref[...][None] * A + wpw_ref[...][None] * B   # (Nb, C*S, 1)
        per_sample = jnp.sum(vec, axis=1)                     # (Nb, 1)

        # Accumulate across the h (spatial-tile) axis directly into the
        # resident output block: one HBM writeback per sample block.
        @pl.when(h == 0)
        def _():
            out_ref[...] = jnp.zeros_like(out_ref)
        out_ref[...] += per_sample

    return kernel


def soft_bce_with_logits_loss(y_pred, y_true, sample_weight, weight, pos_weight):
    """y_pred: (N,C,H,W); y_true: (N,1,H,W); sample_weight: (N,);
    weight, pos_weight: (C,).  Returns scalar mean loss (f32)."""
    N, C, H, W = y_pred.shape
    HW = H * W
    total = N * C * H * W

    in_bytes = jnp.dtype(y_pred.dtype).itemsize
    yt_bytes = jnp.dtype(y_true.dtype).itemsize

    # Sublane fold: free reshape (N,C,HW) -> (N,C*S,HW/S) fills all sublanes
    # of every vreg for any C (8 for f32 inputs, 16 for bf16).
    S = _pick_sublane_fold(C, HW, 32 // in_bytes)
    C_rows = C * S
    HW_f = HW // S

    # Lane tiling (cdiv + in-kernel tail mask) from a padded VMEM footprint
    # model: double-buffered y_pred + y_true tiles plus live f32 temporaries.
    c_rows_pad = _round_up(C_rows, 32 // in_bytes)
    s_pad = _round_up(S, 32 // yt_bytes)
    per_lane = (2 * (c_rows_pad * in_bytes + s_pad * yt_bytes)
                + _TEMPS_F32 * C_rows * 4)
    max_lanes = max(128, (_VMEM_BUDGET_BYTES // per_lane) // 128 * 128)
    hw_tile = min(_round_up(HW_f, 128), max_lanes)
    n_hw = pl.cdiv(HW_f, hw_tile)
    has_tail = (n_hw * hw_tile != HW_f)

    # Sample blocking: if a whole spatial row fits in one tile, block Nb
    # samples per grid step to amortize the ~0.35 us per-step overhead.
    Nb = 1
    if n_hw == 1:
        per_sample_bytes = per_lane * hw_tile
        nb_cap = max(1, _VMEM_BUDGET_BYTES // per_sample_bytes)
        for d in range(min(N, nb_cap), 0, -1):
            if N % d == 0:
                Nb = d
                break
    n_blocks = N // Nb

    # Reshapes only (no wrapper-side data pass over the big tensors).
    yp = y_pred.reshape(N, C_rows, HW_f)
    yt = y_true.reshape(N, S, HW_f)
    w_c = weight.astype(jnp.float32).reshape(C, 1)
    pw_c = pos_weight.astype(jnp.float32).reshape(C, 1)
    w_f = jnp.repeat(w_c, S, axis=0)              # (C_rows, 1)  row c*S+s -> w[c]
    wpw_f = jnp.repeat(w_c * pw_c, S, axis=0)     # (C_rows, 1)  weight * pos_weight

    kernel = _make_kernel(C, hw_tile, HW_f, has_tail)

    partials = pl.pallas_call(
        kernel,
        out_shape=jax.ShapeDtypeStruct((n_blocks, Nb, 1), jnp.float32),
        grid_spec=pltpu.PrefetchScalarGridSpec(
            num_scalar_prefetch=0,
            grid=(n_blocks, n_hw),
            in_specs=[
                # y_pred: (Nb, C_rows, hw_tile) tile per grid step
                pl.BlockSpec((Nb, C_rows, hw_tile), lambda n, h: (n, 0, h)),
                # y_true: matching (Nb, S, hw_tile) tile
                pl.BlockSpec((Nb, S, hw_tile), lambda n, h: (n, 0, h)),
                # per-channel weight and weight*pos_weight: tiny, resident
                pl.BlockSpec((C_rows, 1), lambda n, h: (0, 0)),
                pl.BlockSpec((C_rows, 1), lambda n, h: (0, 0)),
            ],
            # per-sample sums, resident across the h (reduction) axis
            out_specs=pl.BlockSpec((pl.Squeezed(), Nb, 1),
                                   lambda n, h: (n, 0, 0)),
        ),
        compiler_params=pltpu.CompilerParams(
            dimension_semantics=("parallel", "arbitrary"),
            vmem_limit_bytes=_VMEM_LIMIT_BYTES),
        cost_estimate=pl.CostEstimate(
            flops=10 * total,
            transcendentals=2 * total,
            bytes_accessed=(yp.size * in_bytes + yt.size * yt_bytes
                            + N * 4 + 2 * C_rows * 4)),
    )(yp, yt, w_f, wpw_f)

    # Per-sample weight (one scalar per sample) and the mean happen here on N
    # scalars.  reduction='mean' divides by the full element count including
    # ignored positions (matches torch .mean()).
    per_sample = partials.reshape(N)
    loss_sum = jnp.dot(per_sample, sample_weight.astype(jnp.float32))
    return loss_sum / jnp.float32(total)


def _reference(y_pred, y_true, sample_weight, weight, pos_weight):
    """Pure-JAX reference mirroring the PyTorch module semantics."""
    st = (1.0 - y_true) * SMOOTH_FACTOR + y_true * (1.0 - SMOOTH_FACTOR)
    x = y_pred
    log_sig = jax.nn.log_sigmoid(x)
    log_1m_sig = jax.nn.log_sigmoid(-x)
    w = weight[None, :, None, None]
    pw = pos_weight[None, :, None, None]
    loss = -w * (pw * st * log_sig + (1.0 - st) * log_1m_sig)
    loss = loss * sample_weight[:, None, None, None]
    mask = (y_true != IGNORE_INDEX).astype(loss.dtype)
    loss = loss * mask
    return loss.mean()


if __name__ == "__main__":
    N, C, H, W = 2, 4, 16, 16
    key = jax.random.PRNGKey(0)
    k1, k2, k3, k4 = jax.random.split(key, 4)

    y_pred = jax.random.normal(k1, (N, C, H, W), dtype=jnp.float32)
    # binary targets with some positions set to ignore_index
    y_true = jax.random.bernoulli(k2, 0.5, (N, 1, H, W)).astype(jnp.float32)
    ignore_mask = jax.random.bernoulli(k3, 0.1, (N, 1, H, W))
    y_true = jnp.where(ignore_mask, jnp.float32(IGNORE_INDEX), y_true)
    sample_weight = jax.random.uniform(k4, (N,), jnp.float32, 0.5, 1.5)

    # deterministic parameter init (buffers of the module)
    weight = jnp.linspace(0.5, 1.5, C, dtype=jnp.float32)
    pos_weight = jnp.linspace(0.8, 1.2, C, dtype=jnp.float32)

    loss = soft_bce_with_logits_loss(y_pred, y_true, sample_weight,
                                     weight, pos_weight)
    loss = jax.block_until_ready(loss)

    ref = _reference(y_pred, y_true, sample_weight, weight, pos_weight)
    assert jnp.allclose(loss, ref, rtol=1e-5, atol=1e-6), (loss, ref)

    print("KERNEL_OK")
</pallas_src>

<mosaic_0001>
module attributes {stable_mosaic.version = 11 : i64} {
  func.func @kernel(%arg0: i32, %arg1: i32, %arg2: memref<2x8x128xf32, #tpu.memory_space<vmem>>, %arg3: memref<2x2x128xf32, #tpu.memory_space<vmem>>, %arg4: memref<8x1xf32, #tpu.memory_space<vmem>>, %arg5: memref<8x1xf32, #tpu.memory_space<vmem>>, %arg6: memref<1x2x1xf32, #tpu.memory_space<vmem>>) attributes {dimension_semantics = [#tpu.dimension_semantics<parallel>, #tpu.dimension_semantics<arbitrary>], iteration_bounds = array<i64: 1, 1>, scalar_prefetch = 0 : i64, scratch_operands = 0 : i64, tpu.core_type = #tpu.core_type<tc>, window_params = [{transform_indices = @transform_0, window_bounds = array<i64: 2, 8, 128>}, {transform_indices = @transform_1, window_bounds = array<i64: 2, 2, 128>}, {pipeline_mode = #tpu.pipeline_mode<synchronous>, transform_indices = @transform_2, window_bounds = array<i64: 8, 1>}, {pipeline_mode = #tpu.pipeline_mode<synchronous>, transform_indices = @transform_3, window_bounds = array<i64: 8, 1>}, {transform_indices = @transform_4, window_bounds = array<i64: 1, 2, 1>}]} {
    %c0 = arith.constant 0 : index
    %c0_0 = arith.constant 0 : index
    %c0_1 = arith.constant 0 : index
    %0 = vector.load %arg2[%c0, %c0_0, %c0_1] : memref<2x8x128xf32, #tpu.memory_space<vmem>>, vector<2x8x128xf32>
    %c0_2 = arith.constant 0 : index
    %c0_3 = arith.constant 0 : index
    %c0_4 = arith.constant 0 : index
    %1 = vector.load %arg3[%c0_2, %c0_3, %c0_4] : memref<2x2x128xf32, #tpu.memory_space<vmem>>, vector<2x2x128xf32>
    %cst = arith.constant 1.000000e+00 : f32
    %2 = vector.broadcast %cst : f32 to vector<2x2x128xf32>
    %3 = arith.subf %2, %1 : vector<2x2x128xf32>
    %cst_5 = arith.constant 1.000000e-01 : f32
    %4 = vector.broadcast %cst_5 : f32 to vector<2x2x128xf32>
    %5 = arith.mulf %3, %4 : vector<2x2x128xf32>
    %cst_6 = arith.constant 0.899999976 : f32
    %6 = vector.broadcast %cst_6 : f32 to vector<2x2x128xf32>
    %7 = arith.mulf %1, %6 : vector<2x2x128xf32>
    %8 = arith.addf %5, %7 : vector<2x2x128xf32>
    %cst_7 = arith.constant -1.000000e+02 : f32
    %9 = vector.broadcast %cst_7 : f32 to vector<2x2x128xf32>
    %10 = arith.cmpf one, %1, %9 : vector<2x2x128xf32>
    %cst_8 = arith.constant 1.000000e+00 : f32
    %11 = vector.broadcast %cst_8 : f32 to vector<2x2x128xf32>
    %12 = arith.subf %11, %8 : vector<2x2x128xf32>
    %cst_9 = arith.constant 0.000000e+00 : f32
    %13 = vector.broadcast %cst_9 : f32 to vector<2x2x128xf32>
    %14 = arith.select %10, %12, %13 : vector<2x2x128xi1>, vector<2x2x128xf32>
    %cst_10 = arith.constant 0.000000e+00 : f32
    %15 = vector.broadcast %cst_10 : f32 to vector<2x2x128xf32>
    %16 = arith.select %10, %8, %15 : vector<2x2x128xi1>, vector<2x2x128xf32>
    %17 = tpu.concatenate %14, %14, %14, %14 in 1 : vector<2x2x128xf32>, vector<2x2x128xf32>, vector<2x2x128xf32>, vector<2x2x128xf32> -> vector<2x8x128xf32>
    %18 = tpu.concatenate %16, %16, %16, %16 in 1 : vector<2x2x128xf32>, vector<2x2x128xf32>, vector<2x2x128xf32>, vector<2x2x128xf32> -> vector<2x8x128xf32>
    %cst_11 = arith.constant 0.000000e+00 : f32
    %19 = vector.broadcast %cst_11 : f32 to vector<2x8x128xf32>
    %20 = arith.maximumf %0, %19 : vector<2x8x128xf32>
    %21 = math.absf %0 : vector<2x8x128xf32>
    %cst_12 = arith.constant 0.000000e+00 : f32
    %22 = vector.broadcast %cst_12 : f32 to vector<2x8x128xf32>
    %23 = arith.subf %22, %21 : vector<2x8x128xf32>
    %24 = math.exp %23 : vector<2x8x128xf32>
    %25 = math.log1p %24 : vector<2x8x128xf32>
    %26 = arith.addf %20, %25 : vector<2x8x128xf32>
    %27 = arith.subf %26, %0 : vector<2x8x128xf32>
    %28 = arith.mulf %17, %26 : vector<2x8x128xf32>
    %cst_13 = arith.constant dense<0.000000e+00> : vector<2x8xf32>
    %29 = vector.multi_reduction <add>, %28, %cst_13 [2] : vector<2x8x128xf32> to vector<2x8xf32>
    %30 = vector.shape_cast %29 : vector<2x8xf32> to vector<2x8x1xf32>
    %31 = arith.mulf %18, %27 : vector<2x8x128xf32>
    %cst_14 = arith.constant dense<0.000000e+00> : vector<2x8xf32>
    %32 = vector.multi_reduction <add>, %31, %cst_14 [2] : vector<2x8x128xf32> to vector<2x8xf32>
    %33 = vector.shape_cast %32 : vector<2x8xf32> to vector<2x8x1xf32>
    %c0_15 = arith.constant 0 : index
    %c0_16 = arith.constant 0 : index
    %34 = vector.load %arg4[%c0_15, %c0_16] : memref<8x1xf32, #tpu.memory_space<vmem>>, vector<8x1xf32>
    %35 = vector.shape_cast %34 : vector<8x1xf32> to vector<1x8x1xf32>
    %36 = vector.broadcast %35 : vector<1x8x1xf32> to vector<2x8x1xf32>
    %37 = arith.mulf %36, %30 : vector<2x8x1xf32>
    %c0_17 = arith.constant 0 : index
    %c0_18 = arith.constant 0 : index
    %38 = vector.load %arg5[%c0_17, %c0_18] : memref<8x1xf32, #tpu.memory_space<vmem>>, vector<8x1xf32>
    %39 = vector.shape_cast %38 : vector<8x1xf32> to vector<1x8x1xf32>
    %40 = vector.broadcast %39 : vector<1x8x1xf32> to vector<2x8x1xf32>
    %41 = arith.mulf %40, %33 : vector<2x8x1xf32>
    %42 = arith.addf %37, %41 : vector<2x8x1xf32>
    %cst_19 = arith.constant dense<0.000000e+00> : vector<2x1xf32>
    %43 = vector.multi_reduction <add>, %42, %cst_19 [1] : vector<2x8x1xf32> to vector<2x1xf32>
    %c0_i32 = arith.constant 0 : i32
    %44 = arith.cmpi eq, %arg1, %c0_i32 : i32
    %45 = arith.extui %44 : i1 to i32
    %c0_i32_20 = arith.constant 0 : i32
    %46 = arith.cmpi ne, %45, %c0_i32_20 : i32
    scf.if %46 {
      %cst_27 = arith.constant 0.000000e+00 : f32
      %53 = vector.broadcast %cst_27 : f32 to vector<2x1xf32>
      %c0_28 = arith.constant 0 : index
      %c0_29 = arith.constant 0 : index
      %c0_30 = arith.constant 0 : index
      %54 = vector.load %arg6[%c0_28, %c0_29, %c0_30] : memref<1x2x1xf32, #tpu.memory_space<vmem>>, vector<1x2x1xf32>
      %55 = vector.shape_cast %54 : vector<1x2x1xf32> to vector<2x1xf32>
      %56 = vector.shape_cast %53 : vector<2x1xf32> to vector<1x2x1xf32>
      tpu.vector_store %arg6[%c0_28, %c0_29, %c0_30], %56 {strides = array<i32>} : memref<1x2x1xf32, #tpu.memory_space<vmem>>, vector<1x2x1xf32>,
    } else {
    }
    %c0_21 = arith.constant 0 : index
    %c0_22 = arith.constant 0 : index
    %c0_23 = arith.constant 0 : index
    %47 = vector.load %arg6[%c0_21, %c0_22, %c0_23] : memref<1x2x1xf32, #tpu.memory_space<vmem>>, vector<1x2x1xf32>
    %48 = vector.shape_cast %47 : vector<1x2x1xf32> to vector<2x1xf32>
    %49 = arith.addf %48, %43 : vector<2x1xf32>
    %c0_24 = arith.constant 0 : index
    %c0_25 = arith.constant 0 : index
    %c0_26 = arith.constant 0 : index
    %50 = vector.load %arg6[%c0_24, %c0_25, %c0_26] : memref<1x2x1xf32, #tpu.memory_space<vmem>>, vector<1x2x1xf32>
    %51 = vector.shape_cast %50 : vector<1x2x1xf32> to vector<2x1xf32>
    %52 = vector.shape_cast %49 : vector<2x1xf32> to vector<1x2x1xf32>
    tpu.vector_store %arg6[%c0_24, %c0_25, %c0_26], %52 {strides = array<i32>} : memref<1x2x1xf32, #tpu.memory_space<vmem>>, vector<1x2x1xf32>,
    return
  }
  func.func @transform_0(%arg0: i32, %arg1: i32) -> (i32, i32, i32) {
    %c0_i32 = arith.constant 0 : i32
    %c0_i32_0 = arith.constant 0 : i32
    return %arg0, %c0_i32, %arg1 : i32, i32, i32
  }
  func.func @transform_1(%arg0: i32, %arg1: i32) -> (i32, i32, i32) {
    %c0_i32 = arith.constant 0 : i32
    %c0_i32_0 = arith.constant 0 : i32
    return %arg0, %c0_i32, %arg1 : i32, i32, i32
  }
  func.func @transform_2(%arg0: i32, %arg1: i32) -> (i32, i32) {
    %c0_i32 = arith.constant 0 : i32
    %c0_i32_0 = arith.constant 0 : i32
    %c0_i32_1 = arith.constant 0 : i32
    return %c0_i32, %c0_i32_0 : i32, i32
  }
  func.func @transform_3(%arg0: i32, %arg1: i32) -> (i32, i32) {
    %c0_i32 = arith.constant 0 : i32
    %c0_i32_0 = arith.constant 0 : i32
    %c0_i32_1 = arith.constant 0 : i32
    return %c0_i32, %c0_i32_0 : i32, i32
  }
  func.func @transform_4(%arg0: i32, %arg1: i32) -> (i32, i32, i32) {
    %c0_i32 = arith.constant 0 : i32
    %c0_i32_0 = arith.constant 0 : i32
    %c0_i32_1 = arith.constant 0 : i32
    return %arg0, %c0_i32, %c0_i32_0 : i32, i32, i32
  }
}

</mosaic_0001>

<llo_original>
// kernel: tpu_custom_call.1
$region0: #{tpu_custom_call.1}
  #allocation0 [shape = 'u32[]', space=smem, size = 0x4, offset = 0x4, fixed_abs, tag = 'smem constant byte address 0x4 - core index']
  #allocation1 [shape = 'u32[144,128]{1,0:T(1,128)}', space=vmem, size = 0x12000, scoped, tag = 'internal scratch']
  %s0 = inlined_call_operand.vmem [shape: f32[2,8,128], index: 0, kind: input, shape index: {}]
  %s1 = inlined_call_operand.vmem [shape: f32[2,2,128], index: 1, kind: input, shape index: {}]
  %s2 = inlined_call_operand.vmem [shape: f32[8,1], index: 2, kind: input, shape index: {}]
  %s3 = inlined_call_operand.vmem [shape: f32[8,1], index: 3, kind: input, shape index: {}]
  %s4 = inlined_call_operand.vmem [shape: f32[1,2,1], index: 4, kind: output, shape index: {}]
  %s5 = sld [smem:[#allocation0]]
  $region30: #{tpu_custom_call.1} parent=0
    _
  %s7 = ssub.s32 1, %s5
  %s8 = scalar_select 0, %s7, %s5
  // Predicated region
  $region2: #{tpu_custom_call.1} parent=0 // pred_check
    _
  $region3: #{tpu_custom_call.1} parent=0 // pred_check_branch
    %10 = sbr.rel (0) target = $region5
  $region4: #{tpu_custom_call.1} parent=0 // pred_region
    _
  $region5: #{tpu_custom_call.1} parent=0 // pred_fallthru
    _
  // Predicated region
  $region6: #{tpu_custom_call.1} parent=0 // pred_check
    _
  $region7: #{tpu_custom_call.1} parent=0 // pred_check_branch
    %12 = sbr.rel (0) target = $region9
  $region8: #{tpu_custom_call.1} parent=0 // pred_region
    _
  $region9: #{tpu_custom_call.1} parent=0 // pred_fallthru
    _
  // Predicated region
  $region10: #{tpu_custom_call.1} parent=0 // pred_check
    _
  $region11: #{tpu_custom_call.1} parent=0 // pred_check_branch
    %14 = sbr.rel (0) target = $region13
  $region12: #{tpu_custom_call.1} parent=0 // pred_region
    _
  $region13: #{tpu_custom_call.1} parent=0 // pred_fallthru
    _
  // Predicated region
  $region14: #{tpu_custom_call.1} parent=0 // pred_check
    _
  $region15: #{tpu_custom_call.1} parent=0 // pred_check_branch
    %16 = sbr.rel (0) target = $region17
  $region16: #{tpu_custom_call.1} parent=0 // pred_region
    _
  $region17: #{tpu_custom_call.1} parent=0 // pred_fallthru
    _
  %v17 = vld [vmem:[%s0] sm:$0xff]
  %v18 = vld [vmem:[%s0 + $0x8] sm:$0xff]
  %v19 = vld [vmem:[%s1] sm:$0x3]
  %v20 = vld [vmem:[%s1 + $0x2] sm:$0x3]
  %v21 = vsub.f32 1.0, %v19
  %v22 = vsub.f32 1.0, %v20
  %v23 = vmul.f32 %v21, 0.1
  %v24 = vmul.f32 %v22, 0.1
  %v25 = vmul.f32 %v19, 0.9
  %v26 = vmul.f32 %v20, 0.9
  %v27 = vadd.f32 %v23, %v25
  %v28 = vadd.f32 %v24, %v26
  %vm29 = vcmp.ne.f32.partialorder %v19, -100.0
  %vm30 = vcmp.ne.f32.partialorder %v20, -100.0
  %v31 = vsub.f32 1.0, %v27
  %v32 = vsub.f32 1.0, %v28
  %v33 = vsel %vm29, %v31, 0.0
  %v34 = vsel %vm30, %v32, 0.0
  %v35 = vsel %vm29, %v27, 0.0
  %v36 = vsel %vm30, %v28, 0.0
  %v39 = vrot.slane %v33, 6
  %v40 = vrot.slane %v34, 6
  %v43 = vrot.slane %v33, 4
  %v44 = vrot.slane %v34, 4
  %v47 = vrot.slane %v33, 2
  %v48 = vrot.slane %v34, 2
  %vm51 = vcmask 1041408
  %v52 = vsel %vm51, %v33, %v39
  %v53 = vsel %vm51, %v34, %v40
  %vm54 = vcmask 1043456
  %v55 = vsel %vm54, %v52, %v43
  %v56 = vsel %vm54, %v53, %v44
  %vm57 = vcmask 1045504
  %v58 = vsel %vm57, %v55, %v47
  %v59 = vsel %vm57, %v56, %v48
  %v62 = vrot.slane %v35, 6
  %v63 = vrot.slane %v36, 6
  %v66 = vrot.slane %v35, 4
  %v67 = vrot.slane %v36, 4
  %v70 = vrot.slane %v35, 2
  %v71 = vrot.slane %v36, 2
  %v74 = vsel %vm51, %v35, %v62
  %v75 = vsel %vm51, %v36, %v63
  %v76 = vsel %vm54, %v74, %v66
  %v77 = vsel %vm54, %v75, %v67
  %v78 = vsel %vm57, %v76, %v70
  %v79 = vsel %vm57, %v77, %v71
  %v80 = vmax.f32 %v17, 0.0
  %v81 = vmax.f32 %v18, 0.0
  %v82 = vand.u32 2147483647, %v17
  %v83 = vand.u32 2147483647, %v18
  %v84 = vsub.f32 0.0, %v82
  %v85 = vsub.f32 0.0, %v83
  %v86 = vmul.f32 %v84, 1.442695
  %v87 = vpow.pop %v86
  %v88 = vmul.f32 %v85, 1.442695
  %v89 = vpow.pop %v88
  %v90 = vadd.f32 %v87, 1.0
  %v91 = vlog2.pop %v90
  %v92 = vmul.f32 %v91, 0.6931472
  %v93 = vmul.f32 -0.5, %v87
  %v94 = vadd.f32 %v93, 1.0
  %v95 = vmul.f32 %v94, %v87
  %v96 = vand.u32 2147483647, %v87
  %vm97 = vcmp.lt.f32.partialorder %v96, 0.0004427343
  %v98 = vsel %vm97, %v95, %v92
  %v99 = vadd.f32 %v89, 1.0
  %v100 = vlog2.pop %v99
  %v101 = vmul.f32 %v100, 0.6931472
  %v102 = vmul.f32 -0.5, %v89
  %v103 = vadd.f32 %v102, 1.0
  %v104 = vmul.f32 %v103, %v89
  %v105 = vand.u32 2147483647, %v89
  %vm106 = vcmp.lt.f32.partialorder %v105, 0.0004427343
  %v107 = vsel %vm106, %v104, %v101
  %v108 = vadd.f32 %v80, %v98
  %v109 = vadd.f32 %v81, %v107
  %v110 = vsub.f32 %v108, %v17
  %v111 = vsub.f32 %v109, %v18
  %v112 = vmul.f32 %v58, %v108
  %v113 = vmul.f32 %v59, %v109
  %114 = vadd.xlane.f32.xlu0 %v112
  %v115 = vpop.xlane.xlu0 %114
  %116 = vadd.xlane.f32.xlu0 %v113
  %v117 = vpop.xlane.xlu0 %116
  %v118 = vmul.f32 %v78, %v110
  %v119 = vmul.f32 %v79, %v111
  %120 = vadd.xlane.f32.xlu0 %v118
  %v121 = vpop.xlane.xlu0 %120
  %122 = vadd.xlane.f32.xlu0 %v119
  %v123 = vpop.xlane.xlu0 %122
  %v124 = vld [vmem:[%s2] sm:$0xff]
  %v125 = vmul.f32 %v124, %v115
  %v126 = vmul.f32 %v124, %v117
  %v127 = vld [vmem:[%s3] sm:$0xff]
  %v128 = vmul.f32 %v127, %v121
  %v129 = vmul.f32 %v127, %v123
  %v130 = vadd.f32 %v125, %v128
  %v131 = vadd.f32 %v126, %v129
  %vm132 = vcmask 7168
  %v133 = vsel %vm132, %v130, 0.0
  %v134 = vrot.slane %v133, 4
  %v135 = vadd.f32 %v133, %v134
  %v136 = vrot.slane %v135, 2
  %v137 = vadd.f32 %v135, %v136
  %v138 = vrot.slane %v137, 1
  %v139 = vadd.f32 %v137, %v138
  %v140 = vsel %vm132, %v131, 0.0
  %v141 = vrot.slane %v140, 4
  %v142 = vadd.f32 %v140, %v141
  %v143 = vrot.slane %v142, 2
  %v144 = vadd.f32 %v142, %v143
  %v145 = vrot.slane %v144, 1
  %v146 = vadd.f32 %v144, %v145
  %p147 = scmp.eq.s32.totalorder 0, 0
  // Predicated region
  $region18: #{tpu_custom_call.1} parent=0 // pred_check
    %p148 = pneg %p147
  $region19: #{tpu_custom_call.1} parent=0 // pred_check_branch
    %150 = sbr.rel (%p148) target = $region21
  $region20: #{tpu_custom_call.1} parent=0 // pred_region
    %vm151 = vcmask 1024
    %152 = vst.msk [vmem:[%s4] sm:$0x3] %vm151, 0.0
  $region21: #{tpu_custom_call.1} parent=0 // pred_fallthru
    _
  %v153 = vld [vmem:[%s4] sm:$0x3]
  %vm156 = vcmask 1041409
  %v157 = vsel %vm156, %v146, %v139
  %v159 = vadd.f32 %v153, %v157
  %vm160 = vcmask 1024
  %161 = vst.msk [vmem:[%s4] sm:$0x3] %vm160, %v159
  // Predicated region
  $region22: #{tpu_custom_call.1} parent=0 // pred_check
    _
  $region23: #{tpu_custom_call.1} parent=0 // pred_check_branch
    %163 = sbr.rel (0) target = $region25
  $region24: #{tpu_custom_call.1} parent=0 // pred_region
    _
  $region25: #{tpu_custom_call.1} parent=0 // pred_fallthru
    _
  // Predicated region
  $region26: #{tpu_custom_call.1} parent=0 // pred_check
    _
  $region27: #{tpu_custom_call.1} parent=0 // pred_check_branch
    %165 = sbr.rel (0) target = $region29
  $region28: #{tpu_custom_call.1} parent=0 // pred_region
    _
  $region29: #{tpu_custom_call.1} parent=0 // pred_fallthru
    _

</llo_original>
